<compile_context>
chip_gen: v7x
topology: tpu7x:2x2x1
jax: 0.10.0
libtpu: 0.0.40
codegen_flags: <defaults>
</compile_context>

<pallas_src>
import functools

import jax
import jax.numpy as jnp
from jax.experimental import pallas as pl
from jax.experimental.pallas import tpu as pltpu


def _focal_loss_kernel(logp_ref, tgt_ref, out_ref, acc_ref, *,
                       gamma, n_rows, tile_n):
    i = pl.program_id(0)

    @pl.when(i == 0)
    def _init():
        acc_ref[...] = jnp.zeros_like(acc_ref)

    lp = logp_ref[...]                     # (tile_n, C)  input dtype (f32/bf16)
    tgt = tgt_ref[...]                     # (tile_n, 1)  int32 class indices

    # torch.gather(pred_prob, 1, target) performed on the LOG probs: one-hot
    # select via class iota, then a lane reduction.  Only one element per row
    # is nonzero, so the sum is exact even for bf16 inputs.
    col = jax.lax.broadcasted_iota(jnp.int32, lp.shape, dimension=1)
    sel = jnp.where(col == tgt, lp, jnp.zeros_like(lp))
    lp_t = jnp.sum(sel, axis=1, keepdims=True).astype(jnp.float32)  # (tile_n,1)

    pt = jnp.exp(lp_t)                     # only tile_n transcendentals (EUP)
    one_minus_pt = 1.0 - pt

    # modulator = (1 - pt) ** gamma, avoiding the pow (exp/log pair) when easy.
    if gamma == 1.0:
        modulator = one_minus_pt
    elif gamma == 0.0:
        modulator = jnp.ones_like(one_minus_pt)
    elif float(gamma).is_integer() and 0 < gamma <= 8:
        modulator = one_minus_pt
        for _ in range(int(gamma) - 1):
            modulator = modulator * one_minus_pt
    else:
        modulator = one_minus_pt ** gamma  # generic non-integer gamma fallback

    # mce = modulator * -log(pt); -log(pt) == -lp_t exactly (no inf on pt->0).
    mce = modulator * (-lp_t)              # (tile_n, 1) f32

    # Mask padding rows of the last (ragged) tile.
    row = jax.lax.broadcasted_iota(jnp.int32, mce.shape, dimension=0) + i * tile_n
    mce = jnp.where(row < n_rows, mce, 0.0)

    acc_ref[...] += mce

    @pl.when(i == pl.num_programs(0) - 1)
    def _finalize():
        out_ref[0, 0] = jnp.sum(acc_ref[...]) * (1.0 / n_rows)


def _pick_tile_n(n_rows, row_bytes):
    # Keep one input buffer <= ~4 MiB (x2 for double buffering + target tiles)
    # so the kernel fits under the scoped-VMEM default on every generation
    # (v5e 16 MiB, v6e 32 MiB, v7x 32 MiB of a 64 MiB VMEM).
    budget = 4 * 1024 * 1024
    t = max(8, min(budget // max(row_bytes, 1), 1024))
    t = min(t, ((n_rows + 7) // 8) * 8)     # no bigger than (8-padded) N
    return max(8, (t // 8) * 8)


def focal_loss(log_pred_prob_onehot, target, gamma=1.0, tile_n=None):
    """Pallas TPU implementation of FocalLoss.forward.

    Args:
      log_pred_prob_onehot: [N, C] float (f32 or bf16) log-probabilities.
      target:               [N] or [N, 1] integer class indices (int32 range;
                            the PyTorch module uses int64, any realistic C fits).
      gamma:                focusing parameter (default 1, as in the module).
      tile_n:               optional row-tile override (multiple of 8).

    Returns:
      scalar float32 loss == (((1 - pt) ** gamma) * -log(pt)).mean()
    """
    logp = jnp.asarray(log_pred_prob_onehot)   # keep native dtype (bf16 ok)
    N, C = logp.shape
    tgt = jnp.asarray(target).reshape(N, 1).astype(jnp.int32)

    if tile_n is None:
        tile_n = _pick_tile_n(N, C * logp.dtype.itemsize)
    num_tiles = pl.cdiv(N, tile_n)

    kernel = functools.partial(
        _focal_loss_kernel, gamma=float(gamma), n_rows=N, tile_n=tile_n)

    cost = pl.CostEstimate(
        flops=3 * N * C,                 # compare / select / lane-reduce
        transcendentals=N,               # one exp per row
        bytes_accessed=N * C * logp.dtype.itemsize + N * 4 + 4,
    )

    out = pl.pallas_call(
        kernel,
        out_shape=jax.ShapeDtypeStruct((1, 1), jnp.float32),
        grid_spec=pltpu.PrefetchScalarGridSpec(
            num_scalar_prefetch=0,
            grid=(num_tiles,),
            in_specs=[
                pl.BlockSpec((tile_n, C), lambda i: (i, 0)),
                pl.BlockSpec((tile_n, 1), lambda i: (i, 0)),
            ],
            out_specs=pl.BlockSpec(memory_space=pltpu.MemorySpace.SMEM),
            scratch_shapes=[pltpu.VMEM((tile_n, 1), jnp.float32)],
        ),
        compiler_params=pltpu.CompilerParams(
            # Row tiles accumulate into the same scratch -> sequential axis.
            # TODO(synk): on v7x, emit per-tile partials on a "parallel" row
            # axis (both TensorCores) and finish the mean outside the kernel.
            dimension_semantics=("arbitrary",),
        ),
        cost_estimate=cost,
    )(logp, tgt)
    return out[0, 0]


def _reference_focal_loss(logp, target, gamma=1.0):
    # Pure-JAX reference mirroring the PyTorch forward exactly.
    logp = jnp.asarray(logp, dtype=jnp.float32)
    tgt = jnp.asarray(target).reshape(logp.shape[0], 1).astype(jnp.int32)
    pred = jnp.exp(logp)
    pt = jnp.take_along_axis(pred, tgt, axis=1)
    mce = ((1.0 - pt) ** gamma) * (-jnp.log(pt))
    return jnp.mean(mce)


if __name__ == "__main__":
    key = jax.random.PRNGKey(0)
    k1, k2, k3, k4 = jax.random.split(key, 4)

    # Case 1: small shapes matching the module's use (batch 8, 32 classes),
    # default gamma = 1.
    N, C = 8, 32
    logits = jax.random.normal(k1, (N, C), dtype=jnp.float32)
    log_pred = jax.nn.log_softmax(logits, axis=-1)            # [N, C] log-probs
    target = jax.random.randint(k2, (N, 1), 0, C)             # [N, 1] class ids

    loss = jax.block_until_ready(focal_loss(log_pred, target, gamma=1.0))
    ref = _reference_focal_loss(log_pred, target, gamma=1.0)
    assert jnp.allclose(loss, ref, rtol=1e-5, atol=1e-6), (loss, ref)

    # Case 2: multi-tile grid with a ragged last tile (exercises accumulation
    # + row masking) and the integer-gamma fast path.
    N2, C2 = 20, 160
    logits2 = jax.random.normal(k3, (N2, C2), dtype=jnp.float32)
    log_pred2 = jax.nn.log_softmax(logits2, axis=-1)
    target2 = jax.random.randint(k4, (N2,), 0, C2)            # [N] class ids

    loss2 = jax.block_until_ready(
        focal_loss(log_pred2, target2, gamma=2.0, tile_n=8))
    ref2 = _reference_focal_loss(log_pred2, target2, gamma=2.0)
    assert jnp.allclose(loss2, ref2, rtol=1e-5, atol=1e-6), (loss2, ref2)

    print("KERNEL_OK")
</pallas_src>

<mosaic_0001>
module attributes {stable_mosaic.version = 11 : i64} {
  func.func @_focal_loss_kernel(%arg0: i32, %arg1: memref<8x32xf32, #tpu.memory_space<vmem>>, %arg2: memref<8x1xi32, #tpu.memory_space<vmem>>, %arg3: memref<1x1xf32, #tpu.memory_space<smem>>, %arg4: memref<8x1xf32, #tpu.memory_space<vmem>>) attributes {dimension_semantics = [#tpu.dimension_semantics<arbitrary>], iteration_bounds = array<i64: 1>, scalar_prefetch = 0 : i64, scratch_operands = 1 : i64, tpu.core_type = #tpu.core_type<tc>, window_params = [{transform_indices = @transform_0, window_bounds = array<i64: 8, 32>}, {transform_indices = @transform_1, window_bounds = array<i64: 8, 1>}, {transform_indices = @transform_2, window_bounds = array<i64: 1, 1>}]} {
    %c0_i32 = arith.constant 0 : i32
    %0 = arith.cmpi eq, %arg0, %c0_i32 : i32
    %1 = arith.extui %0 : i1 to i32
    %c0_i32_0 = arith.constant 0 : i32
    %2 = arith.cmpi ne, %1, %c0_i32_0 : i32
    scf.if %2 {
      %cst_15 = arith.constant 0.000000e+00 : f32
      %32 = vector.broadcast %cst_15 : f32 to vector<8x1xf32>
      %c0_16 = arith.constant 0 : index
      %c0_17 = arith.constant 0 : index
      %33 = vector.load %arg4[%c0_16, %c0_17] : memref<8x1xf32, #tpu.memory_space<vmem>>, vector<8x1xf32>
      tpu.vector_store %arg4[%c0_16, %c0_17], %32 {strides = array<i32>} : memref<8x1xf32, #tpu.memory_space<vmem>>, vector<8x1xf32>,
    } else {
    }
    %c0 = arith.constant 0 : index
    %c0_1 = arith.constant 0 : index
    %3 = vector.load %arg1[%c0, %c0_1] : memref<8x32xf32, #tpu.memory_space<vmem>>, vector<8x32xf32>
    %c0_2 = arith.constant 0 : index
    %c0_3 = arith.constant 0 : index
    %4 = vector.load %arg2[%c0_2, %c0_3] : memref<8x1xi32, #tpu.memory_space<vmem>>, vector<8x1xi32>
    %5 = tpu.iota {dimensions = array<i32: 1>} : vector<8x32xi32>
    %6 = vector.broadcast %4 : vector<8x1xi32> to vector<8x32xi32>
    %7 = arith.cmpi eq, %5, %6 : vector<8x32xi32>
    %cst = arith.constant 0.000000e+00 : f32
    %8 = vector.broadcast %cst : f32 to vector<8x32xf32>
    %9 = arith.select %7, %3, %8 : vector<8x32xi1>, vector<8x32xf32>
    %cst_4 = arith.constant dense<0.000000e+00> : vector<8xf32>
    %10 = vector.multi_reduction <add>, %9, %cst_4 [1] : vector<8x32xf32> to vector<8xf32>
    %11 = vector.shape_cast %10 : vector<8xf32> to vector<8x1xf32>
    %12 = math.exp %11 : vector<8x1xf32>
    %cst_5 = arith.constant 1.000000e+00 : f32
    %13 = vector.broadcast %cst_5 : f32 to vector<8x1xf32>
    %14 = arith.subf %13, %12 : vector<8x1xf32>
    %cst_6 = arith.constant 0.000000e+00 : f32
    %15 = vector.broadcast %cst_6 : f32 to vector<8x1xf32>
    %16 = arith.subf %15, %11 : vector<8x1xf32>
    %17 = arith.mulf %14, %16 : vector<8x1xf32>
    %18 = tpu.iota {dimensions = array<i32: 0>} : vector<8x1xi32>
    %c8_i32 = arith.constant 8 : i32
    %19 = arith.muli %arg0, %c8_i32 : i32
    %20 = vector.broadcast %19 : i32 to vector<8x1xi32>
    %21 = arith.addi %18, %20 : vector<8x1xi32>
    %c8_i32_7 = arith.constant 8 : i32
    %22 = vector.broadcast %c8_i32_7 : i32 to vector<8x1xi32>
    %23 = arith.cmpi slt, %21, %22 : vector<8x1xi32>
    %cst_8 = arith.constant 0.000000e+00 : f32
    %24 = vector.broadcast %cst_8 : f32 to vector<8x1xf32>
    %25 = arith.select %23, %17, %24 : vector<8x1xi1>, vector<8x1xf32>
    %c0_9 = arith.constant 0 : index
    %c0_10 = arith.constant 0 : index
    %26 = vector.load %arg4[%c0_9, %c0_10] : memref<8x1xf32, #tpu.memory_space<vmem>>, vector<8x1xf32>
    %27 = arith.addf %26, %25 : vector<8x1xf32>
    %c0_11 = arith.constant 0 : index
    %c0_12 = arith.constant 0 : index
    %28 = vector.load %arg4[%c0_11, %c0_12] : memref<8x1xf32, #tpu.memory_space<vmem>>, vector<8x1xf32>
    tpu.vector_store %arg4[%c0_11, %c0_12], %27 {strides = array<i32>} : memref<8x1xf32, #tpu.memory_space<vmem>>, vector<8x1xf32>,
    %c0_i32_13 = arith.constant 0 : i32
    %29 = arith.cmpi eq, %arg0, %c0_i32_13 : i32
    %30 = arith.extui %29 : i1 to i32
    %c0_i32_14 = arith.constant 0 : i32
    %31 = arith.cmpi ne, %30, %c0_i32_14 : i32
    scf.if %31 {
      %c0_15 = arith.constant 0 : index
      %c0_16 = arith.constant 0 : index
      %32 = vector.load %arg4[%c0_15, %c0_16] : memref<8x1xf32, #tpu.memory_space<vmem>>, vector<8x1xf32>
      %33 = vector.shape_cast %32 : vector<8x1xf32> to vector<1x8x1xf32>
      %cst_17 = arith.constant dense<0.000000e+00> : vector<1xf32>
      %34 = vector.multi_reduction <add>, %33, %cst_17 [1, 2] : vector<1x8x1xf32> to vector<1xf32>
      %35 = vector.shape_cast %34 : vector<1xf32> to vector<1x1x1xf32>
      %36 = vector.extract %35[0, 0, 0] : f32 from vector<1x1x1xf32>
      %cst_18 = arith.constant 1.250000e-01 : f32
      %37 = arith.mulf %36, %cst_18 : f32
      %c0_19 = arith.constant 0 : index
      %c0_20 = arith.constant 0 : index
      %38 = memref.load %arg3[%c0_19, %c0_20] : memref<1x1xf32, #tpu.memory_space<smem>>
      memref.store %37, %arg3[%c0_19, %c0_20] : memref<1x1xf32, #tpu.memory_space<smem>>
    } else {
    }
    return
  }
  func.func @transform_0(%arg0: i32) -> (i32, i32) {
    %c0_i32 = arith.constant 0 : i32
    %c0_i32_0 = arith.constant 0 : i32
    return %arg0, %c0_i32 : i32, i32
  }
  func.func @transform_1(%arg0: i32) -> (i32, i32) {
    %c0_i32 = arith.constant 0 : i32
    %c0_i32_0 = arith.constant 0 : i32
    return %arg0, %c0_i32 : i32, i32
  }
  func.func @transform_2(%arg0: i32) -> (i32, i32) {
    %c0_i32 = arith.constant 0 : i32
    %c0_i32_0 = arith.constant 0 : i32
    %c0_i32_1 = arith.constant 0 : i32
    return %c0_i32, %c0_i32_0 : i32, i32
  }
}

</mosaic_0001>

<llo_original>
// kernel: tpu_custom_call.1
$region0: #{tpu_custom_call.1}
  #allocation0 [shape = 'u32[]', space=smem, size = 0x4, offset = 0x4, fixed_abs, tag = 'smem constant byte address 0x4 - core index']
  #allocation1 [shape = 'u32[144,128]{1,0:T(1,128)}', space=vmem, size = 0x12000, scoped, tag = 'internal scratch']
  #allocation2 [shape = 'f32[8,1]{1,0:T(8,128)}', space=vmem, size = 0x1000, scoped, tag = 'scratch operand']
  %s0 = inlined_call_operand.vmem [shape: f32[8,32], index: 0, kind: input, shape index: {}]
  %s1 = inlined_call_operand.vmem [shape: s32[8,1], index: 1, kind: input, shape index: {}]
  %s2 = inlined_call_operand.hbm [shape: f32[1,1], index: 2, kind: output, shape index: {}]
  %s3 = sld [smem:[#allocation0]]
  $region26: #{tpu_custom_call.1} parent=0
    _
  %s5 = ssub.s32 1, %s3
  %s6 = scalar_select 0, %s5, %s3
  $region1: #{tpu_custom_call.1} parent=0
    #allocation3 [shape = 'u8[512]{0}', space=smem, size = 0x200, scoped, tag = 'output window, operand 0, single buffered']
    #allocation4 [shape = 's32[1]{0}', space=sflag, size = 0x4, scoped, tag = 'scoped memory for tpu_custom_call.1']
    %7 = vsyncpa [#allocation4], 0
    // Predicated region
    $region2: #{tpu_custom_call.1} parent=1 // pred_check
      _
    $region3: #{tpu_custom_call.1} parent=1 // pred_check_branch
      %9 = sbr.rel (0) target = $region5
    $region4: #{tpu_custom_call.1} parent=1 // pred_region
      _
    $region5: #{tpu_custom_call.1} parent=1 // pred_fallthru
      _
    // Predicated region
    $region6: #{tpu_custom_call.1} parent=1 // pred_check
      _
    $region7: #{tpu_custom_call.1} parent=1 // pred_check_branch
      %11 = sbr.rel (0) target = $region9
    $region8: #{tpu_custom_call.1} parent=1 // pred_region
      _
    $region9: #{tpu_custom_call.1} parent=1 // pred_fallthru
      _
    %p12 = scmp.eq.s32.totalorder 0, 0
    // Predicated region
    $region10: #{tpu_custom_call.1} parent=1 // pred_check
      %p13 = pneg %p12
    $region11: #{tpu_custom_call.1} parent=1 // pred_check_branch
      %15 = sbr.rel (%p13) target = $region13
    $region12: #{tpu_custom_call.1} parent=1 // pred_region
      %vm16 = vcmask 7168
      %17 = vst.msk [vmem:[#allocation2] sm:$0xff] %vm16, 0.0
    $region13: #{tpu_custom_call.1} parent=1 // pred_fallthru
      _
    %v18 = vld [vmem:[%s0] sm:$0xff]
    %v19 = vld [vmem:[%s1] sm:$0xff]
    %v20 = vlaneseq
    %v21 = vand.u32 %v20, 127
    %22 = vset.pattern.permute.xlu0 0
    %23 = vperm.xlu0 %22, %v19
    %v24 = vpop.permute.xlu0 %23
    %vm25 = vcmp.eq.s32.totalorder %v21, %v24
    %v26 = vsel %vm25, %v18, 0.0
    %vm27 = vcmask 261120
    %v28 = vsel %vm27, %v26, 0.0
    %29 = vadd.xlane.f32.xlu0 %v28
    %v30 = vpop.xlane.xlu0 %29
    %v31 = vmul.f32 %v30, 1.442695
    %v32 = vpow.pop %v31
    %v33 = vsub.f32 1.0, %v32
    %v34 = vsub.f32 0.0, %v30
    %v35 = vmul.f32 %v33, %v34
    %v36 = vlaneseq
    %v37 = vshrl.u32 %v36, 7
    %s38 = smul.u32 0, 8
    %v39 = vstv %s38
    %v40 = vadd.s32 %v37, %v39
    %vm41 = vcmp.lt.s32.totalorder %v40, 8
    %v42 = vsel %vm41, %v35, 0.0
    %v43 = vld [vmem:[#allocation2] sm:$0xff]
    %v44 = vadd.f32 %v43, %v42
    %vm45 = vcmask 7168
    %46 = vst.msk [vmem:[#allocation2] sm:$0xff] %vm45, %v44
    // Predicated region
    $region14: #{tpu_custom_call.1} parent=1 // pred_check
      %p47 = pneg %p12
    $region15: #{tpu_custom_call.1} parent=1 // pred_check_branch
      %49 = sbr.rel (%p47) target = $region17
    $region16: #{tpu_custom_call.1} parent=1 // pred_region
      %v50 = vld [vmem:[#allocation2] sm:$0xff]
      %v51 = vsel %vm45, %v50, 0.0
      %52 = vadd.xlane.f32.xlu0 %v51
      %v53 = vpop.xlane.xlu0 %52
      %v54 = vrot.slane %v53, 4
      %v55 = vadd.f32 %v53, %v54
      %v56 = vrot.slane %v55, 2
      %v57 = vadd.f32 %v55, %v56
      %v58 = vrot.slane %v57, 1
      %v59 = vadd.f32 %v57, %v58
      %s60 = vtos %v59
      %s61 = smul.f32 %s60, 0.125
      %s62 = scalar_lea.smem [#allocation3], 0
      %63 = sst [smem:[%s62]] %s61
    $region17: #{tpu_custom_call.1} parent=1 // pred_fallthru
      _
    // Predicated region
    $region18: #{tpu_custom_call.1} parent=1 // pred_check
      _
    $region19: #{tpu_custom_call.1} parent=1 // pred_check_branch
      %65 = sbr.rel (0) target = $region21
    $region20: #{tpu_custom_call.1} parent=1 // pred_region
      %s67 = ssub.s32 16, 16
      %68 = vsyncadd [#allocation4], %s67
      %71 = dma.smem_to_hbm [#allocation3], 16, %s2, [#allocation4]
    $region21: #{tpu_custom_call.1} parent=1 // pred_fallthru
      _
    // Predicated region
    $region22: #{tpu_custom_call.1} parent=1 // pred_check
      _
    $region23: #{tpu_custom_call.1} parent=1 // pred_check_branch
      %73 = sbr.rel (0) target = $region25
    $region24: #{tpu_custom_call.1} parent=1 // pred_region
      %74 = dma.done [#allocation4], 16
    $region25: #{tpu_custom_call.1} parent=1 // pred_fallthru
      _
    %75 = sfence
    %76 = vsyncpa [#allocation4], 1

</llo_original>
